<compile_context>
chip_gen: v7x
topology: tpu7x:2x2x1
jax: 0.10.0
libtpu: 0.0.40
codegen_flags: <defaults>
</compile_context>

<pallas_src>
import functools

import jax
import jax.numpy as jnp
from jax import lax
from jax.experimental import pallas as pl
from jax.experimental.pallas import tpu as pltpu

EPS = 1e-5  # torch.nn.LayerNorm default


def _fusion_kernel(sw_ref, img_ref, sig_ref, cli_ref,
                   g0_ref, g1_ref, g2_ref, b0_ref, b1_ref, b2_ref,
                   fused_ref, *, inv_d):
    # Softmax weights precomputed in the wrapper; three f32 scalars in SMEM.
    w0 = sw_ref[0]
    w1 = sw_ref[1]
    w2 = sw_ref[2]

    img = img_ref[...].astype(jnp.float32) * w0    # (TB, d0)
    sig = sig_ref[...].astype(jnp.float32) * w1    # (TB, d1)
    cli = cli_ref[...].astype(jnp.float32) * w2    # (TB, d2)

    # LayerNorm statistics, centered two-pass form (matches the reference, avoids
    # E[x^2]-mean^2 cancellation), built from per-modality partial sums so there is
    # no in-kernel concat or (TB, D) temporary. inv_d = 1/D with the true fused D.
    mean = (jnp.sum(img, axis=-1, keepdims=True)
            + jnp.sum(sig, axis=-1, keepdims=True)
            + jnp.sum(cli, axis=-1, keepdims=True)) * inv_d
    imc = img - mean
    sgc = sig - mean
    clc = cli - mean
    var = (jnp.sum(imc * imc, axis=-1, keepdims=True)
           + jnp.sum(sgc * sgc, axis=-1, keepdims=True)
           + jnp.sum(clc * clc, axis=-1, keepdims=True)) * inv_d
    inv = lax.rsqrt(var + EPS)                     # EUP, rides a free slot

    out_dtype = fused_ref.dtype
    d0 = imc.shape[-1]
    d1 = sgc.shape[-1]
    # TODO(synk): collapsing these three lane-offset stores into a single full-width
    # store needs an unaligned minor-dim concat/shift of 32/16/16-wide pieces, which
    # Mosaic does not reliably lower; kept as masked slice stores (1 store/modality).
    fused_ref[:, 0:d0] = (imc * inv * g0_ref[...] + b0_ref[...]).astype(out_dtype)
    fused_ref[:, d0:d0 + d1] = (sgc * inv * g1_ref[...] + b1_ref[...]).astype(out_dtype)
    fused_ref[:, d0 + d1:] = (clc * inv * g2_ref[...] + b2_ref[...]).astype(out_dtype)


def _round_up(x, m):
    return (x + m - 1) // m * m


def attention_fusion(img_feat, signal_feat, clinical_feat, weights, gamma, beta):
    """img_feat: [B, d0], signal_feat: [B, d1], clinical_feat: [B, d2]
    weights: [3], gamma/beta: [D] with D = d0+d1+d2.
    Returns (fused [B, D], soft_weights [3])."""
    B, d0 = img_feat.shape
    d1 = signal_feat.shape[1]
    d2 = clinical_feat.shape[1]
    D = d0 + d1 + d2
    assert img_feat.dtype == signal_feat.dtype == clinical_feat.dtype
    out_dtype = img_feat.dtype

    # 3-element softmax: trivial, computed once in the wrapper (also returned).
    sw = jax.nn.softmax(weights.astype(jnp.float32))        # (3,) kernel scalars
    soft_weights = sw.astype(weights.dtype)                 # reference dtype

    # Split gamma/beta per modality so the kernel never slices across lanes.
    gamma_f = gamma.astype(jnp.float32)
    beta_f = beta.astype(jnp.float32)
    g0 = gamma_f[:d0].reshape(1, d0)
    g1 = gamma_f[d0:d0 + d1].reshape(1, d1)
    g2 = gamma_f[d0 + d1:].reshape(1, d2)
    b0 = beta_f[:d0].reshape(1, d0)
    b1 = beta_f[d0:d0 + d1].reshape(1, d1)
    b2 = beta_f[d0 + d1:].reshape(1, d2)

    # ---- batch tiling --------------------------------------------------------
    # VMEM cost per row from lane-padded widths (every (TB, d) f32 block is padded
    # to 128 lanes in VMEM), x2 for BlockSpec double buffering.
    lane_pad = lambda d: _round_up(d, 128)
    bytes_per_row = (lane_pad(d0) + lane_pad(d1) + lane_pad(d2) + lane_pad(D)) * 4 * 2
    vmem_budget = 24 * 1024 * 1024          # headroom under the 32 MiB scoped limit
    tb_vmem = max(8, (vmem_budget // bytes_per_row) // 8 * 8)
    # At least two grid steps whenever B allows it, so the "parallel" batch axis can
    # shard across both v7x TensorCores; cap at 2048 rows/step to amortize the fixed
    # per-grid-step overhead without blowing VMEM.
    tb_split = _round_up(max(1, (B + 1) // 2), 8)
    TB = int(max(8, min(2048, tb_vmem, tb_split)))

    grid = (pl.cdiv(B, TB),)                # ragged last block; no jnp.pad HBM copy

    row_spec = lambda d: pl.BlockSpec((TB, d), lambda i: (i, 0))
    par_spec = lambda d: pl.BlockSpec((1, d), lambda i: (0, 0))   # resident params

    kernel = functools.partial(_fusion_kernel, inv_d=1.0 / D)
    fused = pl.pallas_call(
        kernel,
        out_shape=jax.ShapeDtypeStruct((B, D), out_dtype),
        grid=grid,
        in_specs=[
            pl.BlockSpec(memory_space=pltpu.MemorySpace.SMEM),    # softmax scales
            row_spec(d0), row_spec(d1), row_spec(d2),
            par_spec(d0), par_spec(d1), par_spec(d2),             # gamma splits
            par_spec(d0), par_spec(d1), par_spec(d2),             # beta splits
        ],
        out_specs=pl.BlockSpec((TB, D), lambda i: (i, 0)),
        compiler_params=pltpu.CompilerParams(
            dimension_semantics=("parallel",),
            vmem_limit_bytes=32 * 1024 * 1024,
        ),
    )(sw, img_feat, signal_feat, clinical_feat, g0, g1, g2, b0, b1, b2)

    return fused, soft_weights


def _reference(img_feat, signal_feat, clinical_feat, weights, gamma, beta):
    sw = jax.nn.softmax(weights)
    fused = jnp.concatenate(
        [sw[0] * img_feat, sw[1] * signal_feat, sw[2] * clinical_feat], axis=1)
    mean = jnp.mean(fused, axis=-1, keepdims=True)
    var = jnp.mean((fused - mean) ** 2, axis=-1, keepdims=True)
    normed = (fused - mean) / jnp.sqrt(var + EPS)
    return normed * gamma + beta, sw


if __name__ == "__main__":
    key = jax.random.PRNGKey(0)
    B = 24                       # not a multiple of TB=16 -> exercises ragged grid
    dims = (32, 16, 16)          # per-modality feature dims
    D = sum(dims)

    k1, k2, k3 = jax.random.split(key, 3)
    img_feat = jax.random.normal(k1, (B, dims[0]), dtype=jnp.float32)
    signal_feat = jax.random.normal(k2, (B, dims[1]), dtype=jnp.float32)
    clinical_feat = jax.random.normal(k3, (B, dims[2]), dtype=jnp.float32)

    # deterministic parameter init (nn.Parameter(torch.ones(3)) + default LayerNorm)
    weights = jnp.ones((3,), dtype=jnp.float32)
    gamma = jnp.ones((D,), dtype=jnp.float32)
    beta = jnp.zeros((D,), dtype=jnp.float32)

    fused, soft_w = attention_fusion(img_feat, signal_feat, clinical_feat,
                                     weights, gamma, beta)
    jax.block_until_ready((fused, soft_w))

    ref_fused, ref_sw = _reference(img_feat, signal_feat, clinical_feat,
                                   weights, gamma, beta)
    assert fused.shape == ref_fused.shape
    assert jnp.allclose(fused, ref_fused, atol=1e-4, rtol=1e-4)
    assert jnp.allclose(soft_w, ref_sw, atol=1e-6, rtol=1e-6)
    print("KERNEL_OK")
</pallas_src>

<mosaic_0001>
module attributes {stable_mosaic.version = 11 : i64} {
  func.func @_fusion_kernel(%arg0: i32, %arg1: memref<3xf32, #tpu.memory_space<smem>>, %arg2: memref<16x32xf32, #tpu.memory_space<vmem>>, %arg3: memref<16x16xf32, #tpu.memory_space<vmem>>, %arg4: memref<16x16xf32, #tpu.memory_space<vmem>>, %arg5: memref<1x32xf32, #tpu.memory_space<vmem>>, %arg6: memref<1x16xf32, #tpu.memory_space<vmem>>, %arg7: memref<1x16xf32, #tpu.memory_space<vmem>>, %arg8: memref<1x32xf32, #tpu.memory_space<vmem>>, %arg9: memref<1x16xf32, #tpu.memory_space<vmem>>, %arg10: memref<1x16xf32, #tpu.memory_space<vmem>>, %arg11: memref<16x64xf32, #tpu.memory_space<vmem>>) attributes {dimension_semantics = [#tpu.dimension_semantics<parallel>], iteration_bounds = array<i64: 2>, scalar_prefetch = 0 : i64, scratch_operands = 0 : i64, tpu.core_type = #tpu.core_type<tc>, window_params = [{transform_indices = @transform_0, window_bounds = array<i64: 3>}, {transform_indices = @transform_1, window_bounds = array<i64: 16, 32>}, {transform_indices = @transform_2, window_bounds = array<i64: 16, 16>}, {transform_indices = @transform_3, window_bounds = array<i64: 16, 16>}, {pipeline_mode = #tpu.pipeline_mode<synchronous>, transform_indices = @transform_4, window_bounds = array<i64: 1, 32>}, {pipeline_mode = #tpu.pipeline_mode<synchronous>, transform_indices = @transform_5, window_bounds = array<i64: 1, 16>}, {pipeline_mode = #tpu.pipeline_mode<synchronous>, transform_indices = @transform_6, window_bounds = array<i64: 1, 16>}, {pipeline_mode = #tpu.pipeline_mode<synchronous>, transform_indices = @transform_7, window_bounds = array<i64: 1, 32>}, {pipeline_mode = #tpu.pipeline_mode<synchronous>, transform_indices = @transform_8, window_bounds = array<i64: 1, 16>}, {pipeline_mode = #tpu.pipeline_mode<synchronous>, transform_indices = @transform_9, window_bounds = array<i64: 1, 16>}, {transform_indices = @transform_10, window_bounds = array<i64: 16, 64>}]} {
    %c0 = arith.constant 0 : index
    %0 = memref.load %arg1[%c0] : memref<3xf32, #tpu.memory_space<smem>>
    %c1 = arith.constant 1 : index
    %1 = memref.load %arg1[%c1] : memref<3xf32, #tpu.memory_space<smem>>
    %c2 = arith.constant 2 : index
    %2 = memref.load %arg1[%c2] : memref<3xf32, #tpu.memory_space<smem>>
    %c0_0 = arith.constant 0 : index
    %c0_1 = arith.constant 0 : index
    %3 = vector.load %arg2[%c0_0, %c0_1] : memref<16x32xf32, #tpu.memory_space<vmem>>, vector<16x32xf32>
    %4 = vector.broadcast %0 : f32 to vector<16x32xf32>
    %5 = arith.mulf %3, %4 : vector<16x32xf32>
    %c0_2 = arith.constant 0 : index
    %c0_3 = arith.constant 0 : index
    %6 = vector.load %arg3[%c0_2, %c0_3] : memref<16x16xf32, #tpu.memory_space<vmem>>, vector<16x16xf32>
    %7 = vector.broadcast %1 : f32 to vector<16x16xf32>
    %8 = arith.mulf %6, %7 : vector<16x16xf32>
    %c0_4 = arith.constant 0 : index
    %c0_5 = arith.constant 0 : index
    %9 = vector.load %arg4[%c0_4, %c0_5] : memref<16x16xf32, #tpu.memory_space<vmem>>, vector<16x16xf32>
    %10 = vector.broadcast %2 : f32 to vector<16x16xf32>
    %11 = arith.mulf %9, %10 : vector<16x16xf32>
    %cst = arith.constant dense<0.000000e+00> : vector<16xf32>
    %12 = vector.multi_reduction <add>, %5, %cst [1] : vector<16x32xf32> to vector<16xf32>
    %13 = vector.shape_cast %12 : vector<16xf32> to vector<16x1xf32>
    %cst_6 = arith.constant dense<0.000000e+00> : vector<16xf32>
    %14 = vector.multi_reduction <add>, %8, %cst_6 [1] : vector<16x16xf32> to vector<16xf32>
    %15 = vector.shape_cast %14 : vector<16xf32> to vector<16x1xf32>
    %16 = arith.addf %13, %15 : vector<16x1xf32>
    %cst_7 = arith.constant dense<0.000000e+00> : vector<16xf32>
    %17 = vector.multi_reduction <add>, %11, %cst_7 [1] : vector<16x16xf32> to vector<16xf32>
    %18 = vector.shape_cast %17 : vector<16xf32> to vector<16x1xf32>
    %19 = arith.addf %16, %18 : vector<16x1xf32>
    %cst_8 = arith.constant 1.562500e-02 : f32
    %20 = vector.broadcast %cst_8 : f32 to vector<16x1xf32>
    %21 = arith.mulf %19, %20 : vector<16x1xf32>
    %22 = vector.broadcast %21 : vector<16x1xf32> to vector<16x32xf32>
    %23 = arith.subf %5, %22 : vector<16x32xf32>
    %24 = vector.broadcast %21 : vector<16x1xf32> to vector<16x16xf32>
    %25 = arith.subf %8, %24 : vector<16x16xf32>
    %26 = vector.broadcast %21 : vector<16x1xf32> to vector<16x16xf32>
    %27 = arith.subf %11, %26 : vector<16x16xf32>
    %28 = arith.mulf %23, %23 : vector<16x32xf32>
    %cst_9 = arith.constant dense<0.000000e+00> : vector<16xf32>
    %29 = vector.multi_reduction <add>, %28, %cst_9 [1] : vector<16x32xf32> to vector<16xf32>
    %30 = vector.shape_cast %29 : vector<16xf32> to vector<16x1xf32>
    %31 = arith.mulf %25, %25 : vector<16x16xf32>
    %cst_10 = arith.constant dense<0.000000e+00> : vector<16xf32>
    %32 = vector.multi_reduction <add>, %31, %cst_10 [1] : vector<16x16xf32> to vector<16xf32>
    %33 = vector.shape_cast %32 : vector<16xf32> to vector<16x1xf32>
    %34 = arith.addf %30, %33 : vector<16x1xf32>
    %35 = arith.mulf %27, %27 : vector<16x16xf32>
    %cst_11 = arith.constant dense<0.000000e+00> : vector<16xf32>
    %36 = vector.multi_reduction <add>, %35, %cst_11 [1] : vector<16x16xf32> to vector<16xf32>
    %37 = vector.shape_cast %36 : vector<16xf32> to vector<16x1xf32>
    %38 = arith.addf %34, %37 : vector<16x1xf32>
    %cst_12 = arith.constant 1.562500e-02 : f32
    %39 = vector.broadcast %cst_12 : f32 to vector<16x1xf32>
    %40 = arith.mulf %38, %39 : vector<16x1xf32>
    %cst_13 = arith.constant 9.99999974E-6 : f32
    %41 = vector.broadcast %cst_13 : f32 to vector<16x1xf32>
    %42 = arith.addf %40, %41 : vector<16x1xf32>
    %43 = math.rsqrt %42 : vector<16x1xf32>
    %44 = vector.broadcast %43 : vector<16x1xf32> to vector<16x32xf32>
    %45 = arith.mulf %23, %44 : vector<16x32xf32>
    %c0_14 = arith.constant 0 : index
    %c0_15 = arith.constant 0 : index
    %46 = vector.load %arg5[%c0_14, %c0_15] : memref<1x32xf32, #tpu.memory_space<vmem>>, vector<1x32xf32>
    %47 = vector.broadcast %46 : vector<1x32xf32> to vector<16x32xf32>
    %48 = arith.mulf %45, %47 : vector<16x32xf32>
    %c0_16 = arith.constant 0 : index
    %c0_17 = arith.constant 0 : index
    %49 = vector.load %arg8[%c0_16, %c0_17] : memref<1x32xf32, #tpu.memory_space<vmem>>, vector<1x32xf32>
    %50 = vector.broadcast %49 : vector<1x32xf32> to vector<16x32xf32>
    %51 = arith.addf %48, %50 : vector<16x32xf32>
    %c0_18 = arith.constant 0 : index
    %c0_19 = arith.constant 0 : index
    %52 = vector.load %arg11[%c0_18, %c0_19] : memref<16x64xf32, #tpu.memory_space<vmem>>, vector<16x32xf32>
    tpu.vector_store %arg11[%c0_18, %c0_19], %51 {strides = array<i32>} : memref<16x64xf32, #tpu.memory_space<vmem>>, vector<16x32xf32>,
    %53 = vector.broadcast %43 : vector<16x1xf32> to vector<16x16xf32>
    %54 = arith.mulf %25, %53 : vector<16x16xf32>
    %c0_20 = arith.constant 0 : index
    %c0_21 = arith.constant 0 : index
    %55 = vector.load %arg6[%c0_20, %c0_21] : memref<1x16xf32, #tpu.memory_space<vmem>>, vector<1x16xf32>
    %56 = vector.broadcast %55 : vector<1x16xf32> to vector<16x16xf32>
    %57 = arith.mulf %54, %56 : vector<16x16xf32>
    %c0_22 = arith.constant 0 : index
    %c0_23 = arith.constant 0 : index
    %58 = vector.load %arg9[%c0_22, %c0_23] : memref<1x16xf32, #tpu.memory_space<vmem>>, vector<1x16xf32>
    %59 = vector.broadcast %58 : vector<1x16xf32> to vector<16x16xf32>
    %60 = arith.addf %57, %59 : vector<16x16xf32>
    %c0_24 = arith.constant 0 : index
    %c32 = arith.constant 32 : index
    %61 = vector.load %arg11[%c0_24, %c32] : memref<16x64xf32, #tpu.memory_space<vmem>>, vector<16x16xf32>
    tpu.vector_store %arg11[%c0_24, %c32], %60 {strides = array<i32>} : memref<16x64xf32, #tpu.memory_space<vmem>>, vector<16x16xf32>,
    %62 = vector.broadcast %43 : vector<16x1xf32> to vector<16x16xf32>
    %63 = arith.mulf %27, %62 : vector<16x16xf32>
    %c0_25 = arith.constant 0 : index
    %c0_26 = arith.constant 0 : index
    %64 = vector.load %arg7[%c0_25, %c0_26] : memref<1x16xf32, #tpu.memory_space<vmem>>, vector<1x16xf32>
    %65 = vector.broadcast %64 : vector<1x16xf32> to vector<16x16xf32>
    %66 = arith.mulf %63, %65 : vector<16x16xf32>
    %c0_27 = arith.constant 0 : index
    %c0_28 = arith.constant 0 : index
    %67 = vector.load %arg10[%c0_27, %c0_28] : memref<1x16xf32, #tpu.memory_space<vmem>>, vector<1x16xf32>
    %68 = vector.broadcast %67 : vector<1x16xf32> to vector<16x16xf32>
    %69 = arith.addf %66, %68 : vector<16x16xf32>
    %c0_29 = arith.constant 0 : index
    %c48 = arith.constant 48 : index
    %70 = vector.load %arg11[%c0_29, %c48] : memref<16x64xf32, #tpu.memory_space<vmem>>, vector<16x16xf32>
    tpu.vector_store %arg11[%c0_29, %c48], %69 {strides = array<i32>} : memref<16x64xf32, #tpu.memory_space<vmem>>, vector<16x16xf32>,
    return
  }
  func.func @transform_0(%arg0: i32) -> i32 {
    %c0_i32 = arith.constant 0 : i32
    %c0_i32_0 = arith.constant 0 : i32
    return %c0_i32 : i32
  }
  func.func @transform_1(%arg0: i32) -> (i32, i32) {
    %c0_i32 = arith.constant 0 : i32
    %c0_i32_0 = arith.constant 0 : i32
    return %arg0, %c0_i32 : i32, i32
  }
  func.func @transform_2(%arg0: i32) -> (i32, i32) {
    %c0_i32 = arith.constant 0 : i32
    %c0_i32_0 = arith.constant 0 : i32
    return %arg0, %c0_i32 : i32, i32
  }
  func.func @transform_3(%arg0: i32) -> (i32, i32) {
    %c0_i32 = arith.constant 0 : i32
    %c0_i32_0 = arith.constant 0 : i32
    return %arg0, %c0_i32 : i32, i32
  }
  func.func @transform_4(%arg0: i32) -> (i32, i32) {
    %c0_i32 = arith.constant 0 : i32
    %c0_i32_0 = arith.constant 0 : i32
    %c0_i32_1 = arith.constant 0 : i32
    return %c0_i32, %c0_i32_0 : i32, i32
  }
  func.func @transform_5(%arg0: i32) -> (i32, i32) {
    %c0_i32 = arith.constant 0 : i32
    %c0_i32_0 = arith.constant 0 : i32
    %c0_i32_1 = arith.constant 0 : i32
    return %c0_i32, %c0_i32_0 : i32, i32
  }
  func.func @transform_6(%arg0: i32) -> (i32, i32) {
    %c0_i32 = arith.constant 0 : i32
    %c0_i32_0 = arith.constant 0 : i32
    %c0_i32_1 = arith.constant 0 : i32
    return %c0_i32, %c0_i32_0 : i32, i32
  }
  func.func @transform_7(%arg0: i32) -> (i32, i32) {
    %c0_i32 = arith.constant 0 : i32
    %c0_i32_0 = arith.constant 0 : i32
    %c0_i32_1 = arith.constant 0 : i32
    return %c0_i32, %c0_i32_0 : i32, i32
  }
  func.func @transform_8(%arg0: i32) -> (i32, i32) {
    %c0_i32 = arith.constant 0 : i32
    %c0_i32_0 = arith.constant 0 : i32
    %c0_i32_1 = arith.constant 0 : i32
    return %c0_i32, %c0_i32_0 : i32, i32
  }
  func.func @transform_9(%arg0: i32) -> (i32, i32) {
    %c0_i32 = arith.constant 0 : i32
    %c0_i32_0 = arith.constant 0 : i32
    %c0_i32_1 = arith.constant 0 : i32
    return %c0_i32, %c0_i32_0 : i32, i32
  }
  func.func @transform_10(%arg0: i32) -> (i32, i32) {
    %c0_i32 = arith.constant 0 : i32
    %c0_i32_0 = arith.constant 0 : i32
    return %arg0, %c0_i32 : i32, i32
  }
}

</mosaic_0001>

<llo_original>
// kernel: tpu_custom_call.1
$region0: #{tpu_custom_call.1}
  #allocation0 [shape = 'u32[]', space=smem, size = 0x4, offset = 0x4, fixed_abs, tag = 'smem constant byte address 0x4 - core index']
  #allocation1 [shape = 'u32[144,128]{1,0:T(1,128)}', space=vmem, size = 0x12000, scoped, tag = 'internal scratch']
  %s0 = inlined_call_operand.vmem [shape: f32[3], index: 0, kind: input, shape index: {}]
  %s1 = inlined_call_operand.vmem [shape: f32[24,32], index: 1, kind: input, shape index: {}]
  %s2 = inlined_call_operand.vmem [shape: f32[24,16], index: 2, kind: input, shape index: {}]
  %s3 = inlined_call_operand.vmem [shape: f32[24,16], index: 3, kind: input, shape index: {}]
  %s4 = inlined_call_operand.vmem [shape: f32[1,32], index: 4, kind: input, shape index: {}]
  %s5 = inlined_call_operand.vmem [shape: f32[1,16], index: 5, kind: input, shape index: {}]
  %s6 = inlined_call_operand.vmem [shape: f32[1,16], index: 6, kind: input, shape index: {}]
  %s7 = inlined_call_operand.vmem [shape: f32[1,32], index: 7, kind: input, shape index: {}]
  %s8 = inlined_call_operand.vmem [shape: f32[1,16], index: 8, kind: input, shape index: {}]
  %s9 = inlined_call_operand.vmem [shape: f32[1,16], index: 9, kind: input, shape index: {}]
  %s10 = inlined_call_operand.hbm [shape: f32[24,64], index: 10, kind: output, shape index: {}]
  %s11 = sld [smem:[#allocation0]]
  $region77: #{tpu_custom_call.1} parent=0
    _
  %s13 = ssub.s32 1, %s11
  %s14 = scalar_select 0, %s13, %s11
  $region1: #{tpu_custom_call.1} parent=0
    #allocation2 [shape = 'u8[512]{0}', space=smem, size = 0x200, scoped, tag = 'input window, operand 0, single buffered']
    #allocation3 [shape = 's32[2]{0}', space=sflag, size = 0x8, scoped, tag = 'scoped memory for tpu_custom_call.1']
    #allocation4 [shape = 's32[2]{0}', space=sflag, size = 0x8, scoped, tag = 'scoped memory for tpu_custom_call.1']
    #allocation5 [shape = 'u8[16384]{0}', space=vmem, size = 0x4000, scoped, tag = 'output window, operand 0']
    %15 = vsyncpa [#allocation4], 0
    %16 = vsyncpa [#allocation3], 0
    %s17 = scalar_lea.sflag [#allocation3], 1
    %18 = vsyncpa %s17, 0
    loop: start=0, step=1, limit=4
    $region2: #{tpu_custom_call.1} parent=1 // loop_pre_header
      _
    $region3: #{tpu_custom_call.1} parent=1 // loop_header
      %s20 = sphi 0, %s24
      %p21 = scmp.ge.s32.totalorder %s20, 4
      %s28 = sphi 0, %s28
      %s30 = sphi 0, %s28
      %s31 = sphi 0, %s30
      %s45 = sphi 0, %s31
      %s51 = sphi 0, %s53
      %s54 = sphi 0, %s51
      %s55 = sphi 0, %s54
      %s71 = sphi 0, %s55
      %s77 = sphi 0, %s79
      %s80 = sphi 0, %s77
      %s81 = sphi 0, %s80
      %s97 = sphi 0, %s81
      %s103 = sphi 0, %s105
      %s106 = sphi 0, %s103
      %s107 = sphi 0, %s106
      %s123 = sphi 0, %s107
      %s127 = sphi 0, %s127
      %s129 = sphi 0, %s127
      %s130 = sphi 0, %s129
      %s144 = sphi 0, %s130
      %s148 = sphi 0, %s148
      %s150 = sphi 0, %s148
      %s151 = sphi 0, %s150
      %s165 = sphi 0, %s151
      %s169 = sphi 0, %s169
      %s171 = sphi 0, %s169
      %s172 = sphi 0, %s171
      %s186 = sphi 0, %s172
      %s190 = sphi 0, %s190
      %s192 = sphi 0, %s190
      %s193 = sphi 0, %s192
      %s207 = sphi 0, %s193
      %s211 = sphi 0, %s211
      %s213 = sphi 0, %s211
      %s214 = sphi 0, %s213
      %s228 = sphi 0, %s214
      %s232 = sphi 0, %s232
      %s234 = sphi 0, %s232
      %s235 = sphi 0, %s234
      %s249 = sphi 0, %s235
      %s255 = sphi 0, %s257
      %s258 = sphi 0, %s255
      %s259 = sphi 0, %s258
      %s275 = sphi 0, %s259
    $region4: #{tpu_custom_call.1} parent=1 // loop_header_branch
      %23 = sbr.rel (%p21) target = $region8
    $region5: #{tpu_custom_call.1} parent=1 // loop_body
      %s25 = ssub.s32 %s20, 1
      %s26 = ssub.s32 %s20, 2
      %s27 = sadd.s32 %s20, 1
      %s29 = sadd.s32 %s28, 1
      %p32 = scmp.eq.s32.totalorder %s20, 1
      %p33 = scmp.ne.s32.totalorder %s28, %s30
      %p34 = scmp.eq.s32.totalorder %s20, 0
      %p35 = por %p33, %p34
      %p36 = scmp.ne.s32.totalorder %s28, %s30
      %p37 = scmp.eq.s32.totalorder %s25, 1
      %p38 = por %p36, %p37
      %p39 = scmp.ne.s32.totalorder %s30, %s31
      %p40 = scmp.eq.s32.totalorder %s25, 0
      %p41 = por %p39, %p40
      %p42 = scmp.ne.s32.totalorder %s30, %s31
      %p43 = scmp.eq.s32.totalorder %s26, 1
      %p44 = por %p42, %p43
      %p46 = scmp.ne.s32.totalorder %s31, %s45
      %p47 = scmp.eq.s32.totalorder %s26, 0
      %p48 = por %p46, %p47
      %s49 = ssub.s32 %s20, %s27
      %p50 = scmp.eq.s32.totalorder %s49, 0
      %s52 = sadd.s32 %s51, 1
      %s53 = scalar_select %p50, %s51, %s52
      %p56 = pneg %p50
      %p57 = scmp.eq.s32.totalorder %s20, 1
      %p58 = por %p56, %p57
      %p59 = scmp.ne.s32.totalorder %s51, %s54
      %p60 = scmp.eq.s32.totalorder %s20, 0
      %p61 = por %p59, %p60
      %p62 = scmp.ne.s32.totalorder %s51, %s54
      %p63 = scmp.eq.s32.totalorder %s25, 1
      %p64 = por %p62, %p63
      %p65 = scmp.ne.s32.totalorder %s54, %s55
      %p66 = scmp.eq.s32.totalorder %s25, 0
      %p67 = por %p65, %p66
      %p68 = scmp.ne.s32.totalorder %s54, %s55
      %p69 = scmp.eq.s32.totalorder %s26, 1
      %p70 = por %p68, %p69
      %p72 = scmp.ne.s32.totalorder %s55, %s71
      %p73 = scmp.eq.s32.totalorder %s26, 0
      %p74 = por %p72, %p73
      %s75 = ssub.s32 %s20, %s27
      %p76 = scmp.eq.s32.totalorder %s75, 0
      %s78 = sadd.s32 %s77, 1
      %s79 = scalar_select %p76, %s77, %s78
      %p82 = pneg %p76
      %p83 = scmp.eq.s32.totalorder %s20, 1
      %p84 = por %p82, %p83
      %p85 = scmp.ne.s32.totalorder %s77, %s80
      %p86 = scmp.eq.s32.totalorder %s20, 0
      %p87 = por %p85, %p86
      %p88 = scmp.ne.s32.totalorder %s77, %s80
      %p89 = scmp.eq.s32.totalorder %s25, 1
      %p90 = por %p88, %p89
      %p91 = scmp.ne.s32.totalorder %s80, %s81
      %p92 = scmp.eq.s32.totalorder %s25, 0
      %p93 = por %p91, %p92
      %p94 = scmp.ne.s32.totalorder %s80, %s81
      %p95 = scmp.eq.s32.totalorder %s26, 1
      %p96 = por %p94, %p95
      %p98 = scmp.ne.s32.totalorder %s81, %s97
      %p99 = scmp.eq.s32.totalorder %s26, 0
      %p100 = por %p98, %p99
      %s101 = ssub.s32 %s20, %s27
      %p102 = scmp.eq.s32.totalorder %s101, 0
      %s104 = sadd.s32 %s103, 1
      %s105 = scalar_select %p102, %s103, %s104
      %p108 = pneg %p102
      %p109 = scmp.eq.s32.totalorder %s20, 1
      %p110 = por %p108, %p109
      %p111 = scmp.ne.s32.totalorder %s103, %s106
      %p112 = scmp.eq.s32.totalorder %s20, 0
      %p113 = por %p111, %p112
      %p114 = scmp.ne.s32.totalorder %s103, %s106
      %p115 = scmp.eq.s32.totalorder %s25, 1
      %p116 = por %p114, %p115
      %p117 = scmp.ne.s32.totalorder %s106, %s107
      %p118 = scmp.eq.s32.totalorder %s25, 0
      %p119 = por %p117, %p118
      %p120 = scmp.ne.s32.totalorder %s106, %s107
      %p121 = scmp.eq.s32.totalorder %s26, 1
      %p122 = por %p120, %p121
      %p124 = scmp.ne.s32.totalorder %s107, %s123
      %p125 = scmp.eq.s32.totalorder %s26, 0
      %p126 = por %p124, %p125
      %s128 = sadd.s32 %s127, 1
      %p131 = scmp.eq.s32.totalorder %s20, 1
      %p132 = scmp.ne.s32.totalorder %s127, %s129
      %p133 = scmp.eq.s32.totalorder %s20, 0
      %p134 = por %p132, %p133
      %p135 = scmp.ne.s32.totalorder %s127, %s129
      %p136 = scmp.eq.s32.totalorder %s25, 1
      %p137 = por %p135, %p136
      %p138 = scmp.ne.s32.totalorder %s129, %s130
      %p139 = scmp.eq.s32.totalorder %s25, 0
      %p140 = por %p138, %p139
      %p141 = scmp.ne.s32.totalorder %s129, %s130
      %p142 = scmp.eq.s32.totalorder %s26, 1
      %p143 = por %p141, %p142
      %p145 = scmp.ne.s32.totalorder %s130, %s144
      %p146 = scmp.eq.s32.totalorder %s26, 0
      %p147 = por %p145, %p146
      %s149 = sadd.s32 %s148, 1
      %p152 = scmp.eq.s32.totalorder %s20, 1
      %p153 = scmp.ne.s32.totalorder %s148, %s150
      %p154 = scmp.eq.s32.totalorder %s20, 0
      %p155 = por %p153, %p154
      %p156 = scmp.ne.s32.totalorder %s148, %s150
      %p157 = scmp.eq.s32.totalorder %s25, 1
      %p158 = por %p156, %p157
      %p159 = scmp.ne.s32.totalorder %s150, %s151
      %p160 = scmp.eq.s32.totalorder %s25, 0
      %p161 = por %p159, %p160
      %p162 = scmp.ne.s32.totalorder %s150, %s151
      %p163 = scmp.eq.s32.totalorder %s26, 1
      %p164 = por %p162, %p163
      %p166 = scmp.ne.s32.totalorder %s151, %s165
      %p167 = scmp.eq.s32.totalorder %s26, 0
      %p168 = por %p166, %p167
      %s170 = sadd.s32 %s169, 1
      %p173 = scmp.eq.s32.totalorder %s20, 1
      %p174 = scmp.ne.s32.totalorder %s169, %s171
      %p175 = scmp.eq.s32.totalorder %s20, 0
      %p176 = por %p174, %p175
      %p177 = scmp.ne.s32.totalorder %s169, %s171
      %p178 = scmp.eq.s32.totalorder %s25, 1
      %p179 = por %p177, %p178
      %p180 = scmp.ne.s32.totalorder %s171, %s172
      %p181 = scmp.eq.s32.totalorder %s25, 0
      %p182 = por %p180, %p181
      %p183 = scmp.ne.s32.totalorder %s171, %s172
      %p184 = scmp.eq.s32.totalorder %s26, 1
      %p185 = por %p183, %p184
      %p187 = scmp.ne.s32.totalorder %s172, %s186
      %p188 = scmp.eq.s32.totalorder %s26, 0
      %p189 = por %p187, %p188
      %s191 = sadd.s32 %s190, 1
      %p194 = scmp.eq.s32.totalorder %s20, 1
      %p195 = scmp.ne.s32.totalorder %s190, %s192
      %p196 = scmp.eq.s32.totalorder %s20, 0
      %p197 = por %p195, %p196
      %p198 = scmp.ne.s32.totalorder %s190, %s192
      %p199 = scmp.eq.s32.totalorder %s25, 1
      %p200 = por %p198, %p199
      %p201 = scmp.ne.s32.totalorder %s192, %s193
      %p202 = scmp.eq.s32.totalorder %s25, 0
      %p203 = por %p201, %p202
      %p204 = scmp.ne.s32.totalorder %s192, %s193
      %p205 = scmp.eq.s32.totalorder %s26, 1
      %p206 = por %p204, %p205
      %p208 = scmp.ne.s32.totalorder %s193, %s207
      %p209 = scmp.eq.s32.totalorder %s26, 0
      %p210 = por %p208, %p209
      %s212 = sadd.s32 %s211, 1
      %p215 = scmp.eq.s32.totalorder %s20, 1
      %p216 = scmp.ne.s32.totalorder %s211, %s213
      %p217 = scmp.eq.s32.totalorder %s20, 0
      %p218 = por %p216, %p217
      %p219 = scmp.ne.s32.totalorder %s211, %s213
      %p220 = scmp.eq.s32.totalorder %s25, 1
      %p221 = por %p219, %p220
      %p222 = scmp.ne.s32.totalorder %s213, %s214
      %p223 = scmp.eq.s32.totalorder %s25, 0
      %p224 = por %p222, %p223
      %p225 = scmp.ne.s32.totalorder %s213, %s214
      %p226 = scmp.eq.s32.totalorder %s26, 1
      %p227 = por %p225, %p226
      %p229 = scmp.ne.s32.totalorder %s214, %s228
      %p230 = scmp.eq.s32.totalorder %s26, 0
      %p231 = por %p229, %p230
      %s233 = sadd.s32 %s232, 1
      %p236 = scmp.eq.s32.totalorder %s20, 1
      %p237 = scmp.ne.s32.totalorder %s232, %s234
      %p238 = scmp.eq.s32.totalorder %s20, 0
      %p239 = por %p237, %p238
      %p240 = scmp.ne.s32.totalorder %s232, %s234
      %p241 = scmp.eq.s32.totalorder %s25, 1
      %p242 = por %p240, %p241
      %p243 = scmp.ne.s32.totalorder %s234, %s235
      %p244 = scmp.eq.s32.totalorder %s25, 0
      %p245 = por %p243, %p244
      %p246 = scmp.ne.s32.totalorder %s234, %s235
      %p247 = scmp.eq.s32.totalorder %s26, 1
      %p248 = por %p246, %p247
      %p250 = scmp.ne.s32.totalorder %s235, %s249
      %p251 = scmp.eq.s32.totalorder %s26, 0
      %p252 = por %p250, %p251
      %s253 = ssub.s32 %s20, %s27
      %p254 = scmp.eq.s32.totalorder %s253, 0
      %s256 = sadd.s32 %s255, 1
      %s257 = scalar_select %p254, %s255, %s256
      %p260 = pneg %p254
      %p261 = scmp.eq.s32.totalorder %s20, 1
      %p262 = por %p260, %p261
      %p263 = scmp.ne.s32.totalorder %s255, %s258
      %p264 = scmp.eq.s32.totalorder %s20, 0
      %p265 = por %p263, %p264
      %p266 = scmp.ne.s32.totalorder %s255, %s258
      %p267 = scmp.eq.s32.totalorder %s25, 1
      %p268 = por %p266, %p267
      %p269 = scmp.ne.s32.totalorder %s258, %s259
      %p270 = scmp.eq.s32.totalorder %s25, 0
      %p271 = por %p269, %p270
      %p272 = scmp.ne.s32.totalorder %s258, %s259
      %p273 = scmp.eq.s32.totalorder %s26, 1
      %p274 = por %p272, %p273
      %p276 = scmp.ne.s32.totalorder %s259, %s275
      %p277 = scmp.eq.s32.totalorder %s26, 0
      %p278 = por %p276, %p277
      %p279 = scmp.le.s32.totalorder 1, %s20
      %p280 = scmp.lt.s32.totalorder %s20, 3
      %p281 = pnand %p279, %p280
      %p282 = pneg %p281
      // Predicated region
      $region9: #{tpu_custom_call.1} parent=5 // pred_check
        _
      $region10: #{tpu_custom_call.1} parent=5 // pred_check_branch
        %284 = sbr.rel (%p281) target = $region12
      $region11: #{tpu_custom_call.1} parent=5 // pred_region
        %s285 = ssub.s32 %s20, 1
        // Predicated region
        $region13: #{tpu_custom_call.1} parent=11 // pred_check
          %p286 = pneg %p41
        $region14: #{tpu_custom_call.1} parent=11 // pred_check_branch
          %288 = sbr.rel (%p286) target = $region16
        $region15: #{tpu_custom_call.1} parent=11 // pred_region
          %s290 = ssub.s32 16, 16
          %291 = vsyncadd [#allocation4], %s290
          %s293 = sshll.u32 %s0, 4
          %s294 = int_to_ptr.vmem [resolvable:$true] %s293
          %296 = dma.vmem_to_smem %s294, 16, [#allocation2], [#allocation4]
        $region16: #{tpu_custom_call.1} parent=11 // pred_fallthru
          _
        // Predicated region
        $region17: #{tpu_custom_call.1} parent=11 // pred_check
          %p297 = pneg %p140
        $region18: #{tpu_custom_call.1} parent=11 // pred_check_branch
          %299 = sbr.rel (%p297) target = $region20
        $region19: #{tpu_custom_call.1} parent=11 // pred_region
          _
        $region20: #{tpu_custom_call.1} parent=11 // pred_fallthru
          _
        // Predicated region
        $region21: #{tpu_custom_call.1} parent=11 // pred_check
          %p300 = pneg %p161
        $region22: #{tpu_custom_call.1} parent=11 // pred_check_branch
          %302 = sbr.rel (%p300) target = $region24
        $region23: #{tpu_custom_call.1} parent=11 // pred_region
          _
        $region24: #{tpu_custom_call.1} parent=11 // pred_fallthru
          _
        // Predicated region
        $region25: #{tpu_custom_call.1} parent=11 // pred_check
          %p303 = pneg %p182
        $region26: #{tpu_custom_call.1} parent=11 // pred_check_branch
          %305 = sbr.rel (%p303) target = $region28
        $region27: #{tpu_custom_call.1} parent=11 // pred_region
          _
        $region28: #{tpu_custom_call.1} parent=11 // pred_fallthru
          _
        // Predicated region
        $region29: #{tpu_custom_call.1} parent=11 // pred_check
          %p306 = pneg %p203
        $region30: #{tpu_custom_call.1} parent=11 // pred_check_branch
          %308 = sbr.rel (%p306) target = $region32
        $region31: #{tpu_custom_call.1} parent=11 // pred_region
          _
        $region32: #{tpu_custom_call.1} parent=11 // pred_fallthru
          _
        // Predicated region
        $region33: #{tpu_custom_call.1} parent=11 // pred_check
          %p309 = pneg %p224
        $region34: #{tpu_custom_call.1} parent=11 // pred_check_branch
          %311 = sbr.rel (%p309) target = $region36
        $region35: #{tpu_custom_call.1} parent=11 // pred_region
          _
        $region36: #{tpu_custom_call.1} parent=11 // pred_fallthru
          _
        // Predicated region
        $region37: #{tpu_custom_call.1} parent=11 // pred_check
          %p312 = pneg %p245
        $region38: #{tpu_custom_call.1} parent=11 // pred_check_branch
          %314 = sbr.rel (%p312) target = $region40
        $region39: #{tpu_custom_call.1} parent=11 // pred_region
          _
        $region40: #{tpu_custom_call.1} parent=11 // pred_fallthru
          _
      $region12: #{tpu_custom_call.1} parent=5 // pred_fallthru
        _
      %p315 = scmp.lt.s32.totalorder %s20, 2
      // Predicated region
      $region41: #{tpu_custom_call.1} parent=5 // pred_check
        %p316 = pneg %p315
      $region42: #{tpu_custom_call.1} parent=5 // pred_check_branch
        %318 = sbr.rel (%p316) target = $region44
      $region43: #{tpu_custom_call.1} parent=5 // pred_region
        // Predicated region
        $region45: #{tpu_custom_call.1} parent=43 // pred_check
          %p319 = pneg %p61
        $region46: #{tpu_custom_call.1} parent=43 // pred_check_branch
          %321 = sbr.rel (%p319) target = $region48
        $region47: #{tpu_custom_call.1} parent=43 // pred_region
          %s322 = smul.u32 2, %s20
          %s323 = ssub.s32 3, %s322
          %p324 = scmp.lt.s32.totalorder %s323, 2
          %s325 = scalar_select %p324, %s323, 2
          %s326 = smul.u32 128, %s325
          %p327 = scmp.lt.s32.totalorder %s322, 2
          %s328 = scalar_select %p327, %s322, 2
          %s329 = smul.addr %s328, 8
          %s330 = scalar_lea.vmem %s1, %s329
          %s331 = smul.u32 2, %s20
          %s332 = ssub.s32 3, %s331
          %p333 = scmp.lt.s32.totalorder %s332, 2
          %s334 = scalar_select %p333, %s332, 2
          %s335 = smul.u32 128, %s334
        $region48: #{tpu_custom_call.1} parent=43 // pred_fallthru
          _
        // Predicated region
        $region49: #{tpu_custom_call.1} parent=43 // pred_check
          %p336 = pneg %p87
        $region50: #{tpu_custom_call.1} parent=43 // pred_check_branch
          %338 = sbr.rel (%p336) target = $region52
        $region51: #{tpu_custom_call.1} parent=43 // pred_region
          %s339 = smul.u32 2, %s20
          %s340 = ssub.s32 3, %s339
          %p341 = scmp.lt.s32.totalorder %s340, 2
          %s342 = scalar_select %p341, %s340, 2
          %s343 = smul.u32 128, %s342
          %p344 = scmp.lt.s32.totalorder %s339, 2
          %s345 = scalar_select %p344, %s339, 2
          %s346 = smul.addr %s345, 8
          %s347 = scalar_lea.vmem %s2, %s346
          %s348 = smul.u32 2, %s20
          %s349 = ssub.s32 3, %s348
          %p350 = scmp.lt.s32.totalorder %s349, 2
          %s351 = scalar_select %p350, %s349, 2
          %s352 = smul.u32 128, %s351
        $region52: #{tpu_custom_call.1} parent=43 // pred_fallthru
          _
        // Predicated region
        $region53: #{tpu_custom_call.1} parent=43 // pred_check
          %p353 = pneg %p113
        $region54: #{tpu_custom_call.1} parent=43 // pred_check_branch
          %355 = sbr.rel (%p353) target = $region56
        $region55: #{tpu_custom_call.1} parent=43 // pred_region
          %s356 = smul.u32 2, %s20
          %s357 = ssub.s32 3, %s356
          %p358 = scmp.lt.s32.totalorder %s357, 2
          %s359 = scalar_select %p358, %s357, 2
          %s360 = smul.u32 128, %s359
          %p361 = scmp.lt.s32.totalorder %s356, 2
          %s362 = scalar_select %p361, %s356, 2
          %s363 = smul.addr %s362, 8
          %s364 = scalar_lea.vmem %s3, %s363
          %s365 = smul.u32 2, %s20
          %s366 = ssub.s32 3, %s365
          %p367 = scmp.lt.s32.totalorder %s366, 2
          %s368 = scalar_select %p367, %s366, 2
          %s369 = smul.u32 128, %s368
        $region56: #{tpu_custom_call.1} parent=43 // pred_fallthru
          _
      $region44: #{tpu_custom_call.1} parent=5 // pred_fallthru
        _
      %p370 = scmp.le.s32.totalorder 1, %s20
      %p371 = scmp.lt.s32.totalorder %s20, 3
      %p372 = pnand %p370, %p371
      %p373 = pneg %p372
      // Predicated region
      $region57: #{tpu_custom_call.1} parent=5 // pred_check
        _
      $region58: #{tpu_custom_call.1} parent=5 // pred_check_branch
        %375 = sbr.rel (%p372) target = $region60
      $region59: #{tpu_custom_call.1} parent=5 // pred_region
        %s376 = ssub.s32 %s20, 1
        // Predicated region
        $region61: #{tpu_custom_call.1} parent=59 // pred_check
          %p377 = pneg %p41
        $region62: #{tpu_custom_call.1} parent=59 // pred_check_branch
          %379 = sbr.rel (%p377) target = $region64
        $region63: #{tpu_custom_call.1} parent=59 // pred_region
          %380 = dma.done [#allocation4], 16
        $region64: #{tpu_custom_call.1} parent=59 // pred_fallthru
          _
        %381 = sfence
        %p382 = pneg %p41
        %p383 = pneg %p38
        %s384 = smul.u32 2, %s25
        %s385 = ssub.s32 3, %s384
        %p386 = scmp.lt.s32.totalorder %s385, 2
        %s387 = scalar_select %p386, %s385, 2
        %s388 = smul.u32 128, %s387
        %p389 = scmp.lt.s32.totalorder %s384, 2
        %s390 = scalar_select %p389, %s384, 2
        %s391 = smul.addr %s390, 8
        %s392 = scalar_lea.vmem %s1, %s391
        %p393 = pneg %p67
        %p394 = pneg %p64
        %s395 = smul.u32 2, %s25
        %s396 = ssub.s32 3, %s395
        %p397 = scmp.lt.s32.totalorder %s396, 2
        %s398 = scalar_select %p397, %s396, 2
        %s399 = smul.u32 128, %s398
        %p400 = scmp.lt.s32.totalorder %s395, 2
        %s401 = scalar_select %p400, %s395, 2
        %s402 = smul.addr %s401, 8
        %s403 = scalar_lea.vmem %s2, %s402
        %p404 = pneg %p93
        %p405 = pneg %p90
        %s406 = smul.u32 2, %s25
        %s407 = ssub.s32 3, %s406
        %p408 = scmp.lt.s32.totalorder %s407, 2
        %s409 = scalar_select %p408, %s407, 2
        %s410 = smul.u32 128, %s409
        %p411 = scmp.lt.s32.totalorder %s406, 2
        %s412 = scalar_select %p411, %s406, 2
        %s413 = smul.addr %s412, 8
        %s414 = scalar_lea.vmem %s3, %s413
        %p415 = pneg %p119
        %p416 = pneg %p116
        %p417 = pneg %p140
        %p418 = pneg %p137
        %p419 = pneg %p161
        %p420 = pneg %p158
        %p421 = pneg %p182
        %p422 = pneg %p179
        %p423 = pneg %p203
        %p424 = pneg %p200
        %p425 = pneg %p224
        %p426 = pneg %p221
        %p427 = pneg %p245
        %p428 = pneg %p242
        %p429 = pneg %p271
        %p430 = pneg %p268
        %s431 = sand.u32 %s258, 1
        %s432 = scalar_lea.sflag [#allocation3], %s431
        %s433 = sand.u32 %s258, 1
        %s434 = smul.addr %s433, 16
        %s435 = scalar_lea.vmem [#allocation5], %s434
        %s436 = smul.u32 2, %s25
        %s437 = ssub.s32 3, %s436
        %p438 = scmp.lt.s32.totalorder %s437, 2
        %s439 = scalar_select %p438, %s437, 2
        %s440 = smul.u32 128, %s439
        %p441 = scmp.lt.s32.totalorder %s436, 2
        %s442 = scalar_select %p441, %s436, 2
        %s443 = smul.addr %s442, 8
        %s444 = scalar_lea.vmem %s1, %s443
        %s445 = smul.u32 2, %s25
        %s446 = ssub.s32 3, %s445
        %p447 = scmp.lt.s32.totalorder %s446, 2
        %s448 = scalar_select %p447, %s446, 2
        %s449 = smul.u32 128, %s448
        %s450 = smul.u32 2, %s25
        %s451 = ssub.s32 3, %s450
        %p452 = scmp.lt.s32.totalorder %s451, 2
        %s453 = scalar_select %p452, %s451, 2
        %s454 = smul.u32 128, %s453
        %p455 = scmp.lt.s32.totalorder %s450, 2
        %s456 = scalar_select %p455, %s450, 2
        %s457 = smul.addr %s456, 8
        %s458 = scalar_lea.vmem %s2, %s457
        %s459 = smul.u32 2, %s25
        %s460 = ssub.s32 3, %s459
        %p461 = scmp.lt.s32.totalorder %s460, 2
        %s462 = scalar_select %p461, %s460, 2
        %s463 = smul.u32 128, %s462
        %s464 = smul.u32 2, %s25
        %s465 = ssub.s32 3, %s464
        %p466 = scmp.lt.s32.totalorder %s465, 2
        %s467 = scalar_select %p466, %s465, 2
        %s468 = smul.u32 128, %s467
        %p469 = scmp.lt.s32.totalorder %s464, 2
        %s470 = scalar_select %p469, %s464, 2
        %s471 = smul.addr %s470, 8
        %s472 = scalar_lea.vmem %s3, %s471
        %s473 = smul.u32 2, %s25
        %s474 = ssub.s32 3, %s473
        %p475 = scmp.lt.s32.totalorder %s474, 2
        %s476 = scalar_select %p475, %s474, 2
        %s477 = smul.u32 128, %s476
        %s478 = smul.u32 2, %s25
        %s479 = ssub.s32 3, %s478
        %p480 = scmp.lt.s32.totalorder %s479, 2
        %s481 = scalar_select %p480, %s479, 2
        %s482 = smul.u32 128, %s481
        %s483 = sld [smem:[#allocation2]]
        %s484 = sld [smem:[#allocation2 + $0x1]]
        %s485 = sld [smem:[#allocation2 + $0x2]]
        %v486 = vld [vmem:[%s444] sm:$0xff]
        %v487 = vld [vmem:[%s444 + $0x8] sm:$0xff]
        %v488 = vstv %s483
        %v489 = vmul.f32 %v486, %v488
        %v490 = vmul.f32 %v487, %v488
        %v491 = vld [vmem:[%s458] sm:$0xff]
        %v492 = vld [vmem:[%s458 + $0x8] sm:$0xff]
        %v493 = vstv %s484
        %v494 = vmul.f32 %v491, %v493
        %v495 = vmul.f32 %v492, %v493
        %v496 = vld [vmem:[%s472] sm:$0xff]
        %v497 = vld [vmem:[%s472 + $0x8] sm:$0xff]
        %v498 = vstv %s485
        %v499 = vmul.f32 %v496, %v498
        %v500 = vmul.f32 %v497, %v498
        %vm501 = vcmask 261120
        %v502 = vsel %vm501, %v489, 0.0
        %503 = vadd.xlane.f32.xlu0 %v502
        %v504 = vpop.xlane.xlu0 %503
        %v505 = vsel %vm501, %v490, 0.0
        %506 = vadd.xlane.f32.xlu0 %v505
        %v507 = vpop.xlane.xlu0 %506
        %vm508 = vcmask 130048
        %v509 = vsel %vm508, %v494, 0.0
        %510 = vadd.xlane.f32.xlu0 %v509
        %v511 = vpop.xlane.xlu0 %510
        %v512 = vsel %vm508, %v495, 0.0
        %513 = vadd.xlane.f32.xlu0 %v512
        %v514 = vpop.xlane.xlu0 %513
        %v515 = vadd.f32 %v504, %v511
        %v516 = vadd.f32 %v507, %v514
        %v517 = vsel %vm508, %v499, 0.0
        %518 = vadd.xlane.f32.xlu0 %v517
        %v519 = vpop.xlane.xlu0 %518
        %v520 = vsel %vm508, %v500, 0.0
        %521 = vadd.xlane.f32.xlu0 %v520
        %v522 = vpop.xlane.xlu0 %521
        %v523 = vadd.f32 %v515, %v519
        %v524 = vadd.f32 %v516, %v522
        %v525 = vmul.f32 %v523, 0.015625
        %v526 = vmul.f32 %v524, 0.015625
        %v527 = vsub.f32 %v489, %v525
        %v528 = vsub.f32 %v490, %v526
        %v529 = vsub.f32 %v494, %v525
        %v530 = vsub.f32 %v495, %v526
        %v531 = vsub.f32 %v499, %v525
        %v532 = vsub.f32 %v500, %v526
        %v533 = vmul.f32 %v527, %v527
        %v534 = vmul.f32 %v528, %v528
        %v535 = vsel %vm501, %v533, 0.0
        %536 = vadd.xlane.f32.xlu0 %v535
        %v537 = vpop.xlane.xlu0 %536
        %v538 = vsel %vm501, %v534, 0.0
        %539 = vadd.xlane.f32.xlu0 %v538
        %v540 = vpop.xlane.xlu0 %539
        %v541 = vmul.f32 %v529, %v529
        %v542 = vmul.f32 %v530, %v530
        %v543 = vsel %vm508, %v541, 0.0
        %544 = vadd.xlane.f32.xlu0 %v543
        %v545 = vpop.xlane.xlu0 %544
        %v546 = vsel %vm508, %v542, 0.0
        %547 = vadd.xlane.f32.xlu0 %v546
        %v548 = vpop.xlane.xlu0 %547
        %v549 = vadd.f32 %v537, %v545
        %v550 = vadd.f32 %v540, %v548
        %v551 = vmul.f32 %v531, %v531
        %v552 = vmul.f32 %v532, %v532
        %v553 = vsel %vm508, %v551, 0.0
        %554 = vadd.xlane.f32.xlu0 %v553
        %v555 = vpop.xlane.xlu0 %554
        %v556 = vsel %vm508, %v552, 0.0
        %557 = vadd.xlane.f32.xlu0 %v556
        %v558 = vpop.xlane.xlu0 %557
        %v559 = vadd.f32 %v549, %v555
        %v560 = vadd.f32 %v550, %v558
        %v561 = vmul.f32 %v559, 0.015625
        %v562 = vmul.f32 %v560, 0.015625
        %v563 = vadd.f32 %v561, 1e-05
        %v564 = vadd.f32 %v562, 1e-05
        %v565 = vrsqrt.pop %v563
        %v566 = vrsqrt.pop %v564
        %v567 = vmul.f32 %v527, %v565
        %v568 = vmul.f32 %v528, %v566
        %v569 = vld [vmem:[%s4] sm:$0x1]
        %v571 = vlaneseq
        %v572 = vshrl.u32 %v571, 7
        %v573 = vsub.s32 0, %v572
        %v574 = vrot.slane %v569, %v573
        %v576 = vmul.f32 %v567, %v574
        %v577 = vmul.f32 %v568, %v574
        %v578 = vld [vmem:[%s7] sm:$0x1]
        %v580 = vlaneseq
        %v581 = vshrl.u32 %v580, 7
        %v582 = vsub.s32 0, %v581
        %v583 = vrot.slane %v578, %v582
        %v585 = vadd.f32 %v576, %v583
        %v586 = vadd.f32 %v577, %v583
        %587 = vst.msk [vmem:[%s435] sm:$0xff] %vm501, %v585
        %588 = vst.msk [vmem:[%s435 + $0x8] sm:$0xff] %vm501, %v586
        %v589 = vmul.f32 %v529, %v565
        %v590 = vmul.f32 %v530, %v566
        %v591 = vld [vmem:[%s5] sm:$0x1]
        %v593 = vlaneseq
        %v594 = vshrl.u32 %v593, 7
        %v595 = vsub.s32 0, %v594
        %v596 = vrot.slane %v591, %v595
        %v598 = vmul.f32 %v589, %v596
        %v599 = vmul.f32 %v590, %v596
        %v600 = vld [vmem:[%s8] sm:$0x1]
        %v602 = vlaneseq
        %v603 = vshrl.u32 %v602, 7
        %v604 = vsub.s32 0, %v603
        %v605 = vrot.slane %v600, %v604
        %v607 = vadd.f32 %v598, %v605
        %v608 = vadd.f32 %v599, %v605
        %611 = vrot.lane.b32.xlu0 %v607, 32
        %v612 = vpop.permute.xlu0 %611
        %613 = vrot.lane.b32.xlu0 %v608, 32
        %v614 = vpop.permute.xlu0 %613
        %vm617 = vcmask 392448
        %618 = vst.msk [vmem:[%s435] sm:$0xff] %vm617, %v612
        %619 = vst.msk [vmem:[%s435 + $0x8] sm:$0xff] %vm617, %v614
        %v620 = vmul.f32 %v531, %v565
        %v621 = vmul.f32 %v532, %v566
        %v622 = vld [vmem:[%s6] sm:$0x1]
        %v624 = vlaneseq
        %v625 = vshrl.u32 %v624, 7
        %v626 = vsub.s32 0, %v625
        %v627 = vrot.slane %v622, %v626
        %v629 = vmul.f32 %v620, %v627
        %v630 = vmul.f32 %v621, %v627
        %v631 = vld [vmem:[%s9] sm:$0x1]
        %v633 = vlaneseq
        %v634 = vshrl.u32 %v633, 7
        %v635 = vsub.s32 0, %v634
        %v636 = vrot.slane %v631, %v635
        %v638 = vadd.f32 %v629, %v636
        %v639 = vadd.f32 %v630, %v636
        %642 = vrot.lane.b32.xlu0 %v638, 48
        %v643 = vpop.permute.xlu0 %642
        %644 = vrot.lane.b32.xlu0 %v639, 48
        %v645 = vpop.permute.xlu0 %644
        %vm648 = vcmask 523648
        %649 = vst.msk [vmem:[%s435] sm:$0xff] %vm648, %v643
        %650 = vst.msk [vmem:[%s435 + $0x8] sm:$0xff] %vm648, %v645
        %s651 = sand.u32 %s258, 1
        %s652 = scalar_lea.sflag [#allocation3], %s651
        %s653 = sand.u32 %s258, 1
        %s654 = smul.addr %s653, 16
        %s655 = scalar_lea.vmem [#allocation5], %s654
        // Predicated region
        $region65: #{tpu_custom_call.1} parent=59 // pred_check
          %p656 = pneg %p268
        $region66: #{tpu_custom_call.1} parent=59 // pred_check_branch
          %658 = sbr.rel (%p656) target = $region68
        $region67: #{tpu_custom_call.1} parent=59 // pred_region
          %s659 = smul.u32 2, %s25
          %s660 = ssub.s32 3, %s659
          %p661 = scmp.lt.s32.totalorder %s660, 2
          %s662 = scalar_select %p661, %s660, 2
          %s663 = smul.u32 128, %s662
          %s665 = ssub.s32 256, %s663
          %666 = vsyncadd %s652, %s665
          %p667 = scmp.ne.s32.totalorder 0, %s663
          %s668 = smul.addr %s659, 128
          %s669 = scalar_lea.hbm %s10, %s668
          %s670 = smul.u32 8, %s662
          %s671 = sshll.u32 %s655, 4
          %s672 = int_to_ptr.vmem [resolvable:$true] %s671
          %s673 = sshll.u32 %s670, 4
          %677 = dma.vmem_to_hbm [thread:$0]  (%p667), %s672, %s673, %s669, %s652, 128, 128, 8
        $region68: #{tpu_custom_call.1} parent=59 // pred_fallthru
          _
      $region60: #{tpu_custom_call.1} parent=5 // pred_fallthru
        _
      %p678 = scmp.le.s32.totalorder 2, %s20
      // Predicated region
      $region69: #{tpu_custom_call.1} parent=5 // pred_check
        %p679 = pneg %p678
      $region70: #{tpu_custom_call.1} parent=5 // pred_check_branch
        %681 = sbr.rel (%p679) target = $region72
      $region71: #{tpu_custom_call.1} parent=5 // pred_region
        %s682 = ssub.s32 %s20, 2
        // Predicated region
        $region73: #{tpu_custom_call.1} parent=71 // pred_check
          %p683 = pneg %p274
        $region74: #{tpu_custom_call.1} parent=71 // pred_check_branch
          %685 = sbr.rel (%p683) target = $region76
        $region75: #{tpu_custom_call.1} parent=71 // pred_region
          %s686 = sand.u32 %s259, 1
          %s687 = scalar_lea.sflag [#allocation3], %s686
          %s688 = sand.u32 %s259, 1
          %s689 = smul.addr %s688, 16
          %s690 = scalar_lea.vmem [#allocation5], %s689
          %691 = dma.done %s687, 256
        $region76: #{tpu_custom_call.1} parent=71 // pred_fallthru
          _
      $region72: #{tpu_custom_call.1} parent=5 // pred_fallthru
        _
    $region6: #{tpu_custom_call.1} parent=1 // loop_footer
      %s24 = sadd.s32 1, %s20
    $region7: #{tpu_custom_call.1} parent=1 // loop_footer_branch
      %19 = sbr.rel target = $region3
    $region8: #{tpu_custom_call.1} parent=1 // loop_exit
      _
    %692 = vsyncpa [#allocation3], 1
    %s693 = scalar_lea.sflag [#allocation3], 1
    %694 = vsyncpa %s693, 1
    %695 = vsyncpa [#allocation4], 1
    %s696 = scalar_lea.sflag [#allocation4], 1
    %697 = vsyncpa %s696, 1

</llo_original>
